<compile_context>
chip_gen: v7x
topology: tpu7x:2x2x1
jax: 0.10.0
libtpu: 0.0.40
codegen_flags: <defaults>
</compile_context>

<pallas_src>
import jax
import jax.numpy as jnp
from jax.experimental import pallas as pl
from jax.experimental.pallas import tpu as pltpu


def _round_up(x, m):
    return (x + m - 1) // m * m


def _make_dsc_kernel(C, cr, n_chunks, need_mask, unroll):
    """Build the kernel with static config baked in via closure.

    C        : number of classes
    cr       : rows per inner chunk (tile-aligned for the input dtypes)
    n_chunks : chunks per grid step (static)
    need_mask: whether padded pixels exist (static)
    unroll   : fori_loop unroll factor
    """

    def kernel(pred_ref, label_ref, out_ref):
        k = pl.program_id(1)

        @pl.when(k == 0)
        def _init():
            out_ref[...] = jnp.zeros_like(out_ref)

        def _fold(v):
            # (cr, 128) -> (8, 128): sum 8-row groups (static sublane-aligned
            # slices of a value; pure VALU, no XLU).
            acc = v[:8]
            for s in range(8, cr, 8):
                acc = acc + v[s:s + 8]
            return acc

        def chunk(i, carry):
            ce_t, in_t, ps_t, ts_t = carry
            off = i * cr
            if not isinstance(off, int):
                off = pl.multiple_of(off, cr)

            lab = label_ref[0, 0, pl.ds(off, cr), :].astype(jnp.int32)   # (cr,128)
            xs = [pred_ref[0, c, pl.ds(off, cr), :].astype(jnp.float32)
                  for c in range(C)]                                     # C x (cr,128)

            # numerically-stable softmax / log-sum-exp over the class axis.
            # The class axis is the "list of vregs" axis -> VALU/EUP only.
            m = xs[0]
            for c in range(1, C):
                m = jnp.maximum(m, xs[c])
            es = [jnp.exp(x - m) for x in xs]                            # EUP
            ssum = es[0]
            for c in range(1, C):
                ssum = ssum + es[c]
            inv = pl.reciprocal(ssum, approx=True)                       # EUP slot
            lse = jnp.log(ssum) + m                                      # EUP

            if need_mask:
                # padded pixels carry label == C: every one-hot term is
                # already zero, only the softmax sum needs masking.
                valid = (lab < C).astype(jnp.float32)

            ce_o, in_o, ps_o, ts_o = [], [], [], []
            for c in range(C):
                soft = es[c] * inv
                if need_mask:
                    soft = soft * valid
                oh = (lab == c).astype(jnp.float32)
                ce_o.append(ce_t[c] + _fold(oh * (lse - xs[c])))
                in_o.append(in_t[c] + _fold(oh * soft))
                ps_o.append(ps_t[c] + _fold(soft))
                ts_o.append(ts_t[c] + _fold(oh))
            return tuple(ce_o), tuple(in_o), tuple(ps_o), tuple(ts_o)

        zero = jnp.zeros((8, 128), jnp.float32)
        init = tuple(tuple(zero for _ in range(C)) for _ in range(4))
        if n_chunks == 1:
            ce_t, in_t, ps_t, ts_t = chunk(0, init)
        else:
            ce_t, in_t, ps_t, ts_t = jax.lax.fori_loop(
                0, n_chunks, chunk, init, unroll=unroll)

        # accumulate into the resident output block (index_map ignores k)
        for c in range(C):
            out_ref[0, 0 * C + c, :, :] += ce_t[c]
            out_ref[0, 1 * C + c, :, :] += in_t[c]
            out_ref[0, 2 * C + c, :, :] += ps_t[c]
            out_ref[0, 3 * C + c, :, :] += ts_t[c]

    return kernel


def dsc_loss(pred, label, intra_weights=None, inter_weight=0.5,
             target_step_bytes=2 * 1024 * 1024):
    """pred: (B, C, H, W) float, label: (B, H, W) int -> scalar DSC loss."""
    B, C, H, W = pred.shape
    N = H * W

    if not jnp.issubdtype(label.dtype, jnp.integer):
        label = label.astype(jnp.int32)
    # TODO(synk): store labels upstream as int8/uint8 (C < 128) to cut label
    # HBM traffic ~4x; the kernel widens in-kernel either way.

    pred_bytes = jnp.dtype(pred.dtype).itemsize
    lab_bytes = jnp.dtype(label.dtype).itemsize
    bytes_per_row = 128 * (C * pred_bytes + lab_bytes)

    # chunk-row granule: native sublane tile for both dtypes (8 rows for
    # 32-bit, 16 for bf16, 32 for int8) so every dynamic slice is tile-aligned.
    sub = max(1, 4 // pred_bytes, 4 // lab_bytes)
    cr = 8 * sub

    # generation-aware VMEM budget (v7x: 64 MiB/TC; v5e/v6e: 128 MiB).
    try:
        vmem_cap = int(pltpu.get_tpu_info().vmem_capacity_bytes)
    except Exception:  # not on a TPU backend / interpret mode
        vmem_cap = 64 * 1024 * 1024
    vmem_budget = max(4 << 20, min(vmem_cap // 4, 24 << 20))

    rows_needed = _round_up(pl.cdiv(N, 128), cr)
    rows_step = max(cr, (target_step_bytes // bytes_per_row) // cr * cr)
    rows_vmem = max(cr, (vmem_budget // (2 * bytes_per_row)) // cr * cr)
    rows = int(min(rows_needed, rows_step, rows_vmem))

    nrows = _round_up(rows_needed, rows)
    K = nrows // rows
    Np = nrows * 128
    need_mask = Np != N

    n_chunks = rows // cr
    if n_chunks % 4 == 0:
        unroll = 4
    elif n_chunks % 2 == 0:
        unroll = 2
    else:
        unroll = 1

    pred3 = pred.reshape(B, C, N)            # keep input dtype (no f32 upcast in HBM)
    label3 = label.reshape(B, 1, N)
    if need_mask:
        pred3 = jnp.pad(pred3, ((0, 0), (0, 0), (0, Np - N)))
        # pad labels with class id C -> one-hot of padded pixels is all-zero
        label3 = jnp.pad(label3, ((0, 0), (0, 0), (0, Np - N)), constant_values=C)
    pred4 = pred3.reshape(B, C, nrows, 128)
    label4 = label3.reshape(B, 1, nrows, 128)

    R = 4 * C   # stat rows: [ce(C), inter(C), psum(C), tsum(C)]
    step_bytes = rows * bytes_per_row
    vmem_limit = int(min(vmem_cap * 3 // 4,
                         max(32 * 1024 * 1024, 4 * step_bytes + (8 << 20))))

    grid_spec = pltpu.PrefetchScalarGridSpec(
        num_scalar_prefetch=0,
        grid=(B, K),
        in_specs=[
            pl.BlockSpec((1, C, rows, 128), lambda b, k: (b, 0, k, 0)),
            pl.BlockSpec((1, 1, rows, 128), lambda b, k: (b, 0, k, 0)),
        ],
        out_specs=pl.BlockSpec((1, R, 8, 128), lambda b, k: (b, 0, 0, 0)),
    )

    # TODO(synk): on v7x (2 TensorCores) a CORE_PARALLEL split of the pixel
    # tile axis would recover ~2x when B == 1; the "parallel" B axis already
    # covers B >= 2.
    out = pl.pallas_call(
        _make_dsc_kernel(C, cr, n_chunks, need_mask, unroll),
        out_shape=jax.ShapeDtypeStruct((B, R, 8, 128), jnp.float32),
        grid_spec=grid_spec,
        compiler_params=pltpu.CompilerParams(
            dimension_semantics=("parallel", "arbitrary"),
            vmem_limit_bytes=vmem_limit),
    )(pred4, label4)

    # ---- tiny JAX glue: final reductions + loss assembly ----
    stats = jnp.sum(out.reshape(B, 4, C, 8 * 128), axis=-1)   # (B, 4, C)
    ce_c, inter, psum, tsum = stats[:, 0], stats[:, 1], stats[:, 2], stats[:, 3]

    has_w = intra_weights is not None
    w = (jnp.asarray(intra_weights, jnp.float32).reshape(C) if has_w
         else jnp.ones((C,), jnp.float32))

    # CrossEntropyLoss(weight=w): sum_i w[y_i]*nll_i / sum_i w[y_i]
    # (with w == 1 this is the plain mean).
    cel = jnp.sum(ce_c * w) / jnp.sum(tsum * w)

    smooth = 1e-5
    dice = (2.0 * inter + smooth) / (psum + tsum + smooth)    # (B, C)
    dice_loss = 1.0 - jnp.sum(dice, axis=0) / B               # (C,)
    dicel = jnp.mean(dice_loss * w) if has_w else jnp.mean(dice_loss)

    return cel * (1.0 - inter_weight) + dicel * inter_weight


def _reference(pred, label, intra_weights, inter_weight):
    """Pure-JAX reference mirroring the PyTorch module, for verification."""
    B, C, H, W = pred.shape
    logits = pred.reshape(B, C, -1).astype(jnp.float32)
    lab = label.reshape(B, -1)
    logp = jax.nn.log_softmax(logits, axis=1)
    onehot = jax.nn.one_hot(lab, C, axis=1, dtype=jnp.float32)      # (B, C, N)
    nll = -jnp.sum(logp * onehot, axis=1)                           # (B, N)
    if intra_weights is not None:
        w = jnp.asarray(intra_weights, jnp.float32)
        w_pix = jnp.take(w, lab)
        cel = jnp.sum(w_pix * nll) / jnp.sum(w_pix)
    else:
        cel = jnp.mean(nll)
    soft = jax.nn.softmax(logits, axis=1)
    smooth = 1e-5
    inter = jnp.sum(soft * onehot, axis=2)
    dice = (2.0 * inter + smooth) / (jnp.sum(soft, axis=2) + jnp.sum(onehot, axis=2) + smooth)
    dl = 1.0 - jnp.sum(dice, axis=0) / B
    if intra_weights is not None:
        dicel = jnp.mean(dl * jnp.asarray(intra_weights, jnp.float32))
    else:
        dicel = jnp.mean(dl)
    return cel * (1.0 - inter_weight) + dicel * inter_weight


if __name__ == "__main__":
    key = jax.random.PRNGKey(0)
    k1, k2, k3, k4, k5, k6 = jax.random.split(key, 6)

    # Case 1: weighted f32, pixel count an exact multiple of 1024
    # (no padding, single tile, single chunk).
    B, C, H, W = 2, 4, 32, 32
    pred = jax.random.normal(k1, (B, C, H, W), dtype=jnp.float32)
    label = jax.random.randint(k2, (B, H, W), 0, C, dtype=jnp.int32)
    iw = [1.0, 2.0, 0.5, 1.5]
    loss = jax.block_until_ready(
        dsc_loss(pred, label, intra_weights=iw, inter_weight=0.5))
    ref = _reference(pred, label, iw, 0.5)
    assert jnp.allclose(loss, ref, rtol=3e-3, atol=3e-3), (loss, ref)

    # Case 2: unweighted, non-multiple pixel count (padded / masked path).
    B2, C2, H2, W2 = 1, 4, 10, 10
    pred2 = jax.random.normal(k3, (B2, C2, H2, W2), dtype=jnp.float32)
    label2 = jax.random.randint(k4, (B2, H2, W2), 0, C2, dtype=jnp.int32)
    loss2 = jax.block_until_ready(
        dsc_loss(pred2, label2, intra_weights=None, inter_weight=0.3))
    ref2 = _reference(pred2, label2, None, 0.3)
    assert jnp.allclose(loss2, ref2, rtol=3e-3, atol=3e-3), (loss2, ref2)

    # Case 3: bf16 logits, odd class count, small step budget so the kernel
    # exercises K > 1 pixel tiles, the in-kernel chunk loop and masking.
    B3, C3, H3, W3 = 2, 3, 91, 91
    pred_c3 = jax.random.normal(k5, (B3, C3, H3, W3), dtype=jnp.bfloat16)
    label_c3 = jax.random.randint(k6, (B3, H3, W3), 0, C3, dtype=jnp.int32)
    iw3 = [0.5, 1.0, 2.0]
    loss3 = jax.block_until_ready(
        dsc_loss(pred_c3, label_c3, intra_weights=iw3, inter_weight=0.6,
                 target_step_bytes=45000))
    ref3 = _reference(pred_c3, label_c3, iw3, 0.6)
    assert jnp.allclose(loss3, ref3, rtol=3e-3, atol=3e-3), (loss3, ref3)

    print("KERNEL_OK")
</pallas_src>

<mosaic_0001>
module attributes {stable_mosaic.version = 11 : i64} {
  func.func @kernel(%arg0: i32, %arg1: i32, %arg2: memref<1x4x8x128xf32, #tpu.memory_space<vmem>>, %arg3: memref<1x1x8x128xi32, #tpu.memory_space<vmem>>, %arg4: memref<1x16x8x128xf32, #tpu.memory_space<vmem>>) attributes {dimension_semantics = [#tpu.dimension_semantics<parallel>, #tpu.dimension_semantics<arbitrary>], iteration_bounds = array<i64: 2, 1>, scalar_prefetch = 0 : i64, scratch_operands = 0 : i64, tpu.core_type = #tpu.core_type<tc>, window_params = [{transform_indices = @transform_0, window_bounds = array<i64: 1, 4, 8, 128>}, {transform_indices = @transform_1, window_bounds = array<i64: 1, 1, 8, 128>}, {transform_indices = @transform_2, window_bounds = array<i64: 1, 16, 8, 128>}]} {
    %c0_i32 = arith.constant 0 : i32
    %0 = arith.cmpi eq, %arg1, %c0_i32 : i32
    %1 = arith.extui %0 : i1 to i32
    %c0_i32_0 = arith.constant 0 : i32
    %2 = arith.cmpi ne, %1, %c0_i32_0 : i32
    scf.if %2 {
      %cst_134 = arith.constant 0.000000e+00 : f32
      %175 = vector.broadcast %cst_134 : f32 to vector<1x16x8x128xf32>
      %c0_135 = arith.constant 0 : index
      %c0_136 = arith.constant 0 : index
      %c0_137 = arith.constant 0 : index
      %c0_138 = arith.constant 0 : index
      %176 = vector.load %arg4[%c0_135, %c0_136, %c0_137, %c0_138] : memref<1x16x8x128xf32, #tpu.memory_space<vmem>>, vector<1x16x8x128xf32>
      tpu.vector_store %arg4[%c0_135, %c0_136, %c0_137, %c0_138], %175 {strides = array<i32>} : memref<1x16x8x128xf32, #tpu.memory_space<vmem>>, vector<1x16x8x128xf32>,
    } else {
    }
    %cst = arith.constant 0.000000e+00 : f32
    %3 = vector.broadcast %cst : f32 to vector<8x128xf32>
    %c0 = arith.constant 0 : index
    %c0_1 = arith.constant 0 : index
    %c0_2 = arith.constant 0 : index
    %c0_3 = arith.constant 0 : index
    %4 = vector.load %arg3[%c0, %c0_1, %c0_2, %c0_3] : memref<1x1x8x128xi32, #tpu.memory_space<vmem>>, vector<1x1x8x128xi32>
    %5 = vector.shape_cast %4 : vector<1x1x8x128xi32> to vector<8x128xi32>
    %c0_4 = arith.constant 0 : index
    %c0_5 = arith.constant 0 : index
    %c0_6 = arith.constant 0 : index
    %c0_7 = arith.constant 0 : index
    %6 = vector.load %arg2[%c0_4, %c0_5, %c0_6, %c0_7] : memref<1x4x8x128xf32, #tpu.memory_space<vmem>>, vector<1x1x8x128xf32>
    %7 = vector.shape_cast %6 : vector<1x1x8x128xf32> to vector<8x128xf32>
    %c0_8 = arith.constant 0 : index
    %c1 = arith.constant 1 : index
    %c0_9 = arith.constant 0 : index
    %c0_10 = arith.constant 0 : index
    %8 = vector.load %arg2[%c0_8, %c1, %c0_9, %c0_10] : memref<1x4x8x128xf32, #tpu.memory_space<vmem>>, vector<1x1x8x128xf32>
    %9 = vector.shape_cast %8 : vector<1x1x8x128xf32> to vector<8x128xf32>
    %c0_11 = arith.constant 0 : index
    %c2 = arith.constant 2 : index
    %c0_12 = arith.constant 0 : index
    %c0_13 = arith.constant 0 : index
    %10 = vector.load %arg2[%c0_11, %c2, %c0_12, %c0_13] : memref<1x4x8x128xf32, #tpu.memory_space<vmem>>, vector<1x1x8x128xf32>
    %11 = vector.shape_cast %10 : vector<1x1x8x128xf32> to vector<8x128xf32>
    %c0_14 = arith.constant 0 : index
    %c3 = arith.constant 3 : index
    %c0_15 = arith.constant 0 : index
    %c0_16 = arith.constant 0 : index
    %12 = vector.load %arg2[%c0_14, %c3, %c0_15, %c0_16] : memref<1x4x8x128xf32, #tpu.memory_space<vmem>>, vector<1x1x8x128xf32>
    %13 = vector.shape_cast %12 : vector<1x1x8x128xf32> to vector<8x128xf32>
    %14 = arith.maximumf %7, %9 : vector<8x128xf32>
    %15 = arith.maximumf %14, %11 : vector<8x128xf32>
    %16 = arith.maximumf %15, %13 : vector<8x128xf32>
    %17 = arith.subf %7, %16 : vector<8x128xf32>
    %18 = math.exp %17 : vector<8x128xf32>
    %19 = arith.subf %9, %16 : vector<8x128xf32>
    %20 = math.exp %19 : vector<8x128xf32>
    %21 = arith.subf %11, %16 : vector<8x128xf32>
    %22 = math.exp %21 : vector<8x128xf32>
    %23 = arith.subf %13, %16 : vector<8x128xf32>
    %24 = math.exp %23 : vector<8x128xf32>
    %25 = arith.addf %18, %20 : vector<8x128xf32>
    %26 = arith.addf %25, %22 : vector<8x128xf32>
    %27 = arith.addf %26, %24 : vector<8x128xf32>
    %28 = tpu.reciprocal %27 {approx = true} : vector<8x128xf32> -> vector<8x128xf32>
    %29 = math.log %27 : vector<8x128xf32>
    %30 = arith.addf %29, %16 : vector<8x128xf32>
    %31 = arith.mulf %18, %28 : vector<8x128xf32>
    %c0_i32_17 = arith.constant 0 : i32
    %32 = vector.broadcast %c0_i32_17 : i32 to vector<8x128xi32>
    %33 = arith.cmpi eq, %5, %32 : vector<8x128xi32>
    %34 = arith.extui %33 : vector<8x128xi1> to vector<8x128xi32>
    %35 = arith.sitofp %34 : vector<8x128xi32> to vector<8x128xf32>
    %36 = arith.subf %30, %7 : vector<8x128xf32>
    %37 = arith.mulf %35, %36 : vector<8x128xf32>
    %38 = arith.addf %3, %37 : vector<8x128xf32>
    %39 = arith.mulf %35, %31 : vector<8x128xf32>
    %40 = arith.addf %3, %39 : vector<8x128xf32>
    %41 = arith.addf %3, %31 : vector<8x128xf32>
    %42 = arith.addf %3, %35 : vector<8x128xf32>
    %43 = arith.mulf %20, %28 : vector<8x128xf32>
    %c1_i32 = arith.constant 1 : i32
    %44 = vector.broadcast %c1_i32 : i32 to vector<8x128xi32>
    %45 = arith.cmpi eq, %5, %44 : vector<8x128xi32>
    %46 = arith.extui %45 : vector<8x128xi1> to vector<8x128xi32>
    %47 = arith.sitofp %46 : vector<8x128xi32> to vector<8x128xf32>
    %48 = arith.subf %30, %9 : vector<8x128xf32>
    %49 = arith.mulf %47, %48 : vector<8x128xf32>
    %50 = arith.addf %3, %49 : vector<8x128xf32>
    %51 = arith.mulf %47, %43 : vector<8x128xf32>
    %52 = arith.addf %3, %51 : vector<8x128xf32>
    %53 = arith.addf %3, %43 : vector<8x128xf32>
    %54 = arith.addf %3, %47 : vector<8x128xf32>
    %55 = arith.mulf %22, %28 : vector<8x128xf32>
    %c2_i32 = arith.constant 2 : i32
    %56 = vector.broadcast %c2_i32 : i32 to vector<8x128xi32>
    %57 = arith.cmpi eq, %5, %56 : vector<8x128xi32>
    %58 = arith.extui %57 : vector<8x128xi1> to vector<8x128xi32>
    %59 = arith.sitofp %58 : vector<8x128xi32> to vector<8x128xf32>
    %60 = arith.subf %30, %11 : vector<8x128xf32>
    %61 = arith.mulf %59, %60 : vector<8x128xf32>
    %62 = arith.addf %3, %61 : vector<8x128xf32>
    %63 = arith.mulf %59, %55 : vector<8x128xf32>
    %64 = arith.addf %3, %63 : vector<8x128xf32>
    %65 = arith.addf %3, %55 : vector<8x128xf32>
    %66 = arith.addf %3, %59 : vector<8x128xf32>
    %67 = arith.mulf %24, %28 : vector<8x128xf32>
    %c3_i32 = arith.constant 3 : i32
    %68 = vector.broadcast %c3_i32 : i32 to vector<8x128xi32>
    %69 = arith.cmpi eq, %5, %68 : vector<8x128xi32>
    %70 = arith.extui %69 : vector<8x128xi1> to vector<8x128xi32>
    %71 = arith.sitofp %70 : vector<8x128xi32> to vector<8x128xf32>
    %72 = arith.subf %30, %13 : vector<8x128xf32>
    %73 = arith.mulf %71, %72 : vector<8x128xf32>
    %74 = arith.addf %3, %73 : vector<8x128xf32>
    %75 = arith.mulf %71, %67 : vector<8x128xf32>
    %76 = arith.addf %3, %75 : vector<8x128xf32>
    %77 = arith.addf %3, %67 : vector<8x128xf32>
    %78 = arith.addf %3, %71 : vector<8x128xf32>
    %c0_18 = arith.constant 0 : index
    %c0_19 = arith.constant 0 : index
    %c0_20 = arith.constant 0 : index
    %c0_21 = arith.constant 0 : index
    %79 = vector.load %arg4[%c0_18, %c0_19, %c0_20, %c0_21] : memref<1x16x8x128xf32, #tpu.memory_space<vmem>>, vector<1x1x8x128xf32>
    %80 = vector.shape_cast %79 : vector<1x1x8x128xf32> to vector<8x128xf32>
    %81 = arith.addf %80, %38 : vector<8x128xf32>
    %c0_22 = arith.constant 0 : index
    %c0_23 = arith.constant 0 : index
    %c0_24 = arith.constant 0 : index
    %c0_25 = arith.constant 0 : index
    %82 = vector.load %arg4[%c0_22, %c0_23, %c0_24, %c0_25] : memref<1x16x8x128xf32, #tpu.memory_space<vmem>>, vector<1x1x8x128xf32>
    %83 = vector.shape_cast %82 : vector<1x1x8x128xf32> to vector<8x128xf32>
    %84 = vector.shape_cast %81 : vector<8x128xf32> to vector<1x1x8x128xf32>
    tpu.vector_store %arg4[%c0_22, %c0_23, %c0_24, %c0_25], %84 {strides = array<i32>} : memref<1x16x8x128xf32, #tpu.memory_space<vmem>>, vector<1x1x8x128xf32>,
    %c0_26 = arith.constant 0 : index
    %c4 = arith.constant 4 : index
    %c0_27 = arith.constant 0 : index
    %c0_28 = arith.constant 0 : index
    %85 = vector.load %arg4[%c0_26, %c4, %c0_27, %c0_28] : memref<1x16x8x128xf32, #tpu.memory_space<vmem>>, vector<1x1x8x128xf32>
    %86 = vector.shape_cast %85 : vector<1x1x8x128xf32> to vector<8x128xf32>
    %87 = arith.addf %86, %40 : vector<8x128xf32>
    %c0_29 = arith.constant 0 : index
    %c4_30 = arith.constant 4 : index
    %c0_31 = arith.constant 0 : index
    %c0_32 = arith.constant 0 : index
    %88 = vector.load %arg4[%c0_29, %c4_30, %c0_31, %c0_32] : memref<1x16x8x128xf32, #tpu.memory_space<vmem>>, vector<1x1x8x128xf32>
    %89 = vector.shape_cast %88 : vector<1x1x8x128xf32> to vector<8x128xf32>
    %90 = vector.shape_cast %87 : vector<8x128xf32> to vector<1x1x8x128xf32>
    tpu.vector_store %arg4[%c0_29, %c4_30, %c0_31, %c0_32], %90 {strides = array<i32>} : memref<1x16x8x128xf32, #tpu.memory_space<vmem>>, vector<1x1x8x128xf32>,
    %c0_33 = arith.constant 0 : index
    %c8 = arith.constant 8 : index
    %c0_34 = arith.constant 0 : index
    %c0_35 = arith.constant 0 : index
    %91 = vector.load %arg4[%c0_33, %c8, %c0_34, %c0_35] : memref<1x16x8x128xf32, #tpu.memory_space<vmem>>, vector<1x1x8x128xf32>
    %92 = vector.shape_cast %91 : vector<1x1x8x128xf32> to vector<8x128xf32>
    %93 = arith.addf %92, %41 : vector<8x128xf32>
    %c0_36 = arith.constant 0 : index
    %c8_37 = arith.constant 8 : index
    %c0_38 = arith.constant 0 : index
    %c0_39 = arith.constant 0 : index
    %94 = vector.load %arg4[%c0_36, %c8_37, %c0_38, %c0_39] : memref<1x16x8x128xf32, #tpu.memory_space<vmem>>, vector<1x1x8x128xf32>
    %95 = vector.shape_cast %94 : vector<1x1x8x128xf32> to vector<8x128xf32>
    %96 = vector.shape_cast %93 : vector<8x128xf32> to vector<1x1x8x128xf32>
    tpu.vector_store %arg4[%c0_36, %c8_37, %c0_38, %c0_39], %96 {strides = array<i32>} : memref<1x16x8x128xf32, #tpu.memory_space<vmem>>, vector<1x1x8x128xf32>,
    %c0_40 = arith.constant 0 : index
    %c12 = arith.constant 12 : index
    %c0_41 = arith.constant 0 : index
    %c0_42 = arith.constant 0 : index
    %97 = vector.load %arg4[%c0_40, %c12, %c0_41, %c0_42] : memref<1x16x8x128xf32, #tpu.memory_space<vmem>>, vector<1x1x8x128xf32>
    %98 = vector.shape_cast %97 : vector<1x1x8x128xf32> to vector<8x128xf32>
    %99 = arith.addf %98, %42 : vector<8x128xf32>
    %c0_43 = arith.constant 0 : index
    %c12_44 = arith.constant 12 : index
    %c0_45 = arith.constant 0 : index
    %c0_46 = arith.constant 0 : index
    %100 = vector.load %arg4[%c0_43, %c12_44, %c0_45, %c0_46] : memref<1x16x8x128xf32, #tpu.memory_space<vmem>>, vector<1x1x8x128xf32>
    %101 = vector.shape_cast %100 : vector<1x1x8x128xf32> to vector<8x128xf32>
    %102 = vector.shape_cast %99 : vector<8x128xf32> to vector<1x1x8x128xf32>
    tpu.vector_store %arg4[%c0_43, %c12_44, %c0_45, %c0_46], %102 {strides = array<i32>} : memref<1x16x8x128xf32, #tpu.memory_space<vmem>>, vector<1x1x8x128xf32>,
    %c0_47 = arith.constant 0 : index
    %c1_48 = arith.constant 1 : index
    %c0_49 = arith.constant 0 : index
    %c0_50 = arith.constant 0 : index
    %103 = vector.load %arg4[%c0_47, %c1_48, %c0_49, %c0_50] : memref<1x16x8x128xf32, #tpu.memory_space<vmem>>, vector<1x1x8x128xf32>
    %104 = vector.shape_cast %103 : vector<1x1x8x128xf32> to vector<8x128xf32>
    %105 = arith.addf %104, %50 : vector<8x128xf32>
    %c0_51 = arith.constant 0 : index
    %c1_52 = arith.constant 1 : index
    %c0_53 = arith.constant 0 : index
    %c0_54 = arith.constant 0 : index
    %106 = vector.load %arg4[%c0_51, %c1_52, %c0_53, %c0_54] : memref<1x16x8x128xf32, #tpu.memory_space<vmem>>, vector<1x1x8x128xf32>
    %107 = vector.shape_cast %106 : vector<1x1x8x128xf32> to vector<8x128xf32>
    %108 = vector.shape_cast %105 : vector<8x128xf32> to vector<1x1x8x128xf32>
    tpu.vector_store %arg4[%c0_51, %c1_52, %c0_53, %c0_54], %108 {strides = array<i32>} : memref<1x16x8x128xf32, #tpu.memory_space<vmem>>, vector<1x1x8x128xf32>,
    %c0_55 = arith.constant 0 : index
    %c5 = arith.constant 5 : index
    %c0_56 = arith.constant 0 : index
    %c0_57 = arith.constant 0 : index
    %109 = vector.load %arg4[%c0_55, %c5, %c0_56, %c0_57] : memref<1x16x8x128xf32, #tpu.memory_space<vmem>>, vector<1x1x8x128xf32>
    %110 = vector.shape_cast %109 : vector<1x1x8x128xf32> to vector<8x128xf32>
    %111 = arith.addf %110, %52 : vector<8x128xf32>
    %c0_58 = arith.constant 0 : index
    %c5_59 = arith.constant 5 : index
    %c0_60 = arith.constant 0 : index
    %c0_61 = arith.constant 0 : index
    %112 = vector.load %arg4[%c0_58, %c5_59, %c0_60, %c0_61] : memref<1x16x8x128xf32, #tpu.memory_space<vmem>>, vector<1x1x8x128xf32>
    %113 = vector.shape_cast %112 : vector<1x1x8x128xf32> to vector<8x128xf32>
    %114 = vector.shape_cast %111 : vector<8x128xf32> to vector<1x1x8x128xf32>
    tpu.vector_store %arg4[%c0_58, %c5_59, %c0_60, %c0_61], %114 {strides = array<i32>} : memref<1x16x8x128xf32, #tpu.memory_space<vmem>>, vector<1x1x8x128xf32>,
    %c0_62 = arith.constant 0 : index
    %c9 = arith.constant 9 : index
    %c0_63 = arith.constant 0 : index
    %c0_64 = arith.constant 0 : index
    %115 = vector.load %arg4[%c0_62, %c9, %c0_63, %c0_64] : memref<1x16x8x128xf32, #tpu.memory_space<vmem>>, vector<1x1x8x128xf32>
    %116 = vector.shape_cast %115 : vector<1x1x8x128xf32> to vector<8x128xf32>
    %117 = arith.addf %116, %53 : vector<8x128xf32>
    %c0_65 = arith.constant 0 : index
    %c9_66 = arith.constant 9 : index
    %c0_67 = arith.constant 0 : index
    %c0_68 = arith.constant 0 : index
    %118 = vector.load %arg4[%c0_65, %c9_66, %c0_67, %c0_68] : memref<1x16x8x128xf32, #tpu.memory_space<vmem>>, vector<1x1x8x128xf32>
    %119 = vector.shape_cast %118 : vector<1x1x8x128xf32> to vector<8x128xf32>
    %120 = vector.shape_cast %117 : vector<8x128xf32> to vector<1x1x8x128xf32>
    tpu.vector_store %arg4[%c0_65, %c9_66, %c0_67, %c0_68], %120 {strides = array<i32>} : memref<1x16x8x128xf32, #tpu.memory_space<vmem>>, vector<1x1x8x128xf32>,
    %c0_69 = arith.constant 0 : index
    %c13 = arith.constant 13 : index
    %c0_70 = arith.constant 0 : index
    %c0_71 = arith.constant 0 : index
    %121 = vector.load %arg4[%c0_69, %c13, %c0_70, %c0_71] : memref<1x16x8x128xf32, #tpu.memory_space<vmem>>, vector<1x1x8x128xf32>
    %122 = vector.shape_cast %121 : vector<1x1x8x128xf32> to vector<8x128xf32>
    %123 = arith.addf %122, %54 : vector<8x128xf32>
    %c0_72 = arith.constant 0 : index
    %c13_73 = arith.constant 13 : index
    %c0_74 = arith.constant 0 : index
    %c0_75 = arith.constant 0 : index
    %124 = vector.load %arg4[%c0_72, %c13_73, %c0_74, %c0_75] : memref<1x16x8x128xf32, #tpu.memory_space<vmem>>, vector<1x1x8x128xf32>
    %125 = vector.shape_cast %124 : vector<1x1x8x128xf32> to vector<8x128xf32>
    %126 = vector.shape_cast %123 : vector<8x128xf32> to vector<1x1x8x128xf32>
    tpu.vector_store %arg4[%c0_72, %c13_73, %c0_74, %c0_75], %126 {strides = array<i32>} : memref<1x16x8x128xf32, #tpu.memory_space<vmem>>, vector<1x1x8x128xf32>,
    %c0_76 = arith.constant 0 : index
    %c2_77 = arith.constant 2 : index
    %c0_78 = arith.constant 0 : index
    %c0_79 = arith.constant 0 : index
    %127 = vector.load %arg4[%c0_76, %c2_77, %c0_78, %c0_79] : memref<1x16x8x128xf32, #tpu.memory_space<vmem>>, vector<1x1x8x128xf32>
    %128 = vector.shape_cast %127 : vector<1x1x8x128xf32> to vector<8x128xf32>
    %129 = arith.addf %128, %62 : vector<8x128xf32>
    %c0_80 = arith.constant 0 : index
    %c2_81 = arith.constant 2 : index
    %c0_82 = arith.constant 0 : index
    %c0_83 = arith.constant 0 : index
    %130 = vector.load %arg4[%c0_80, %c2_81, %c0_82, %c0_83] : memref<1x16x8x128xf32, #tpu.memory_space<vmem>>, vector<1x1x8x128xf32>
    %131 = vector.shape_cast %130 : vector<1x1x8x128xf32> to vector<8x128xf32>
    %132 = vector.shape_cast %129 : vector<8x128xf32> to vector<1x1x8x128xf32>
    tpu.vector_store %arg4[%c0_80, %c2_81, %c0_82, %c0_83], %132 {strides = array<i32>} : memref<1x16x8x128xf32, #tpu.memory_space<vmem>>, vector<1x1x8x128xf32>,
    %c0_84 = arith.constant 0 : index
    %c6 = arith.constant 6 : index
    %c0_85 = arith.constant 0 : index
    %c0_86 = arith.constant 0 : index
    %133 = vector.load %arg4[%c0_84, %c6, %c0_85, %c0_86] : memref<1x16x8x128xf32, #tpu.memory_space<vmem>>, vector<1x1x8x128xf32>
    %134 = vector.shape_cast %133 : vector<1x1x8x128xf32> to vector<8x128xf32>
    %135 = arith.addf %134, %64 : vector<8x128xf32>
    %c0_87 = arith.constant 0 : index
    %c6_88 = arith.constant 6 : index
    %c0_89 = arith.constant 0 : index
    %c0_90 = arith.constant 0 : index
    %136 = vector.load %arg4[%c0_87, %c6_88, %c0_89, %c0_90] : memref<1x16x8x128xf32, #tpu.memory_space<vmem>>, vector<1x1x8x128xf32>
    %137 = vector.shape_cast %136 : vector<1x1x8x128xf32> to vector<8x128xf32>
    %138 = vector.shape_cast %135 : vector<8x128xf32> to vector<1x1x8x128xf32>
    tpu.vector_store %arg4[%c0_87, %c6_88, %c0_89, %c0_90], %138 {strides = array<i32>} : memref<1x16x8x128xf32, #tpu.memory_space<vmem>>, vector<1x1x8x128xf32>,
    %c0_91 = arith.constant 0 : index
    %c10 = arith.constant 10 : index
    %c0_92 = arith.constant 0 : index
    %c0_93 = arith.constant 0 : index
    %139 = vector.load %arg4[%c0_91, %c10, %c0_92, %c0_93] : memref<1x16x8x128xf32, #tpu.memory_space<vmem>>, vector<1x1x8x128xf32>
    %140 = vector.shape_cast %139 : vector<1x1x8x128xf32> to vector<8x128xf32>
    %141 = arith.addf %140, %65 : vector<8x128xf32>
    %c0_94 = arith.constant 0 : index
    %c10_95 = arith.constant 10 : index
    %c0_96 = arith.constant 0 : index
    %c0_97 = arith.constant 0 : index
    %142 = vector.load %arg4[%c0_94, %c10_95, %c0_96, %c0_97] : memref<1x16x8x128xf32, #tpu.memory_space<vmem>>, vector<1x1x8x128xf32>
    %143 = vector.shape_cast %142 : vector<1x1x8x128xf32> to vector<8x128xf32>
    %144 = vector.shape_cast %141 : vector<8x128xf32> to vector<1x1x8x128xf32>
    tpu.vector_store %arg4[%c0_94, %c10_95, %c0_96, %c0_97], %144 {strides = array<i32>} : memref<1x16x8x128xf32, #tpu.memory_space<vmem>>, vector<1x1x8x128xf32>,
    %c0_98 = arith.constant 0 : index
    %c14 = arith.constant 14 : index
    %c0_99 = arith.constant 0 : index
    %c0_100 = arith.constant 0 : index
    %145 = vector.load %arg4[%c0_98, %c14, %c0_99, %c0_100] : memref<1x16x8x128xf32, #tpu.memory_space<vmem>>, vector<1x1x8x128xf32>
    %146 = vector.shape_cast %145 : vector<1x1x8x128xf32> to vector<8x128xf32>
    %147 = arith.addf %146, %66 : vector<8x128xf32>
    %c0_101 = arith.constant 0 : index
    %c14_102 = arith.constant 14 : index
    %c0_103 = arith.constant 0 : index
    %c0_104 = arith.constant 0 : index
    %148 = vector.load %arg4[%c0_101, %c14_102, %c0_103, %c0_104] : memref<1x16x8x128xf32, #tpu.memory_space<vmem>>, vector<1x1x8x128xf32>
    %149 = vector.shape_cast %148 : vector<1x1x8x128xf32> to vector<8x128xf32>
    %150 = vector.shape_cast %147 : vector<8x128xf32> to vector<1x1x8x128xf32>
    tpu.vector_store %arg4[%c0_101, %c14_102, %c0_103, %c0_104], %150 {strides = array<i32>} : memref<1x16x8x128xf32, #tpu.memory_space<vmem>>, vector<1x1x8x128xf32>,
    %c0_105 = arith.constant 0 : index
    %c3_106 = arith.constant 3 : index
    %c0_107 = arith.constant 0 : index
    %c0_108 = arith.constant 0 : index
    %151 = vector.load %arg4[%c0_105, %c3_106, %c0_107, %c0_108] : memref<1x16x8x128xf32, #tpu.memory_space<vmem>>, vector<1x1x8x128xf32>
    %152 = vector.shape_cast %151 : vector<1x1x8x128xf32> to vector<8x128xf32>
    %153 = arith.addf %152, %74 : vector<8x128xf32>
    %c0_109 = arith.constant 0 : index
    %c3_110 = arith.constant 3 : index
    %c0_111 = arith.constant 0 : index
    %c0_112 = arith.constant 0 : index
    %154 = vector.load %arg4[%c0_109, %c3_110, %c0_111, %c0_112] : memref<1x16x8x128xf32, #tpu.memory_space<vmem>>, vector<1x1x8x128xf32>
    %155 = vector.shape_cast %154 : vector<1x1x8x128xf32> to vector<8x128xf32>
    %156 = vector.shape_cast %153 : vector<8x128xf32> to vector<1x1x8x128xf32>
    tpu.vector_store %arg4[%c0_109, %c3_110, %c0_111, %c0_112], %156 {strides = array<i32>} : memref<1x16x8x128xf32, #tpu.memory_space<vmem>>, vector<1x1x8x128xf32>,
    %c0_113 = arith.constant 0 : index
    %c7 = arith.constant 7 : index
    %c0_114 = arith.constant 0 : index
    %c0_115 = arith.constant 0 : index
    %157 = vector.load %arg4[%c0_113, %c7, %c0_114, %c0_115] : memref<1x16x8x128xf32, #tpu.memory_space<vmem>>, vector<1x1x8x128xf32>
    %158 = vector.shape_cast %157 : vector<1x1x8x128xf32> to vector<8x128xf32>
    %159 = arith.addf %158, %76 : vector<8x128xf32>
    %c0_116 = arith.constant 0 : index
    %c7_117 = arith.constant 7 : index
    %c0_118 = arith.constant 0 : index
    %c0_119 = arith.constant 0 : index
    %160 = vector.load %arg4[%c0_116, %c7_117, %c0_118, %c0_119] : memref<1x16x8x128xf32, #tpu.memory_space<vmem>>, vector<1x1x8x128xf32>
    %161 = vector.shape_cast %160 : vector<1x1x8x128xf32> to vector<8x128xf32>
    %162 = vector.shape_cast %159 : vector<8x128xf32> to vector<1x1x8x128xf32>
    tpu.vector_store %arg4[%c0_116, %c7_117, %c0_118, %c0_119], %162 {strides = array<i32>} : memref<1x16x8x128xf32, #tpu.memory_space<vmem>>, vector<1x1x8x128xf32>,
    %c0_120 = arith.constant 0 : index
    %c11 = arith.constant 11 : index
    %c0_121 = arith.constant 0 : index
    %c0_122 = arith.constant 0 : index
    %163 = vector.load %arg4[%c0_120, %c11, %c0_121, %c0_122] : memref<1x16x8x128xf32, #tpu.memory_space<vmem>>, vector<1x1x8x128xf32>
    %164 = vector.shape_cast %163 : vector<1x1x8x128xf32> to vector<8x128xf32>
    %165 = arith.addf %164, %77 : vector<8x128xf32>
    %c0_123 = arith.constant 0 : index
    %c11_124 = arith.constant 11 : index
    %c0_125 = arith.constant 0 : index
    %c0_126 = arith.constant 0 : index
    %166 = vector.load %arg4[%c0_123, %c11_124, %c0_125, %c0_126] : memref<1x16x8x128xf32, #tpu.memory_space<vmem>>, vector<1x1x8x128xf32>
    %167 = vector.shape_cast %166 : vector<1x1x8x128xf32> to vector<8x128xf32>
    %168 = vector.shape_cast %165 : vector<8x128xf32> to vector<1x1x8x128xf32>
    tpu.vector_store %arg4[%c0_123, %c11_124, %c0_125, %c0_126], %168 {strides = array<i32>} : memref<1x16x8x128xf32, #tpu.memory_space<vmem>>, vector<1x1x8x128xf32>,
    %c0_127 = arith.constant 0 : index
    %c15 = arith.constant 15 : index
    %c0_128 = arith.constant 0 : index
    %c0_129 = arith.constant 0 : index
    %169 = vector.load %arg4[%c0_127, %c15, %c0_128, %c0_129] : memref<1x16x8x128xf32, #tpu.memory_space<vmem>>, vector<1x1x8x128xf32>
    %170 = vector.shape_cast %169 : vector<1x1x8x128xf32> to vector<8x128xf32>
    %171 = arith.addf %170, %78 : vector<8x128xf32>
    %c0_130 = arith.constant 0 : index
    %c15_131 = arith.constant 15 : index
    %c0_132 = arith.constant 0 : index
    %c0_133 = arith.constant 0 : index
    %172 = vector.load %arg4[%c0_130, %c15_131, %c0_132, %c0_133] : memref<1x16x8x128xf32, #tpu.memory_space<vmem>>, vector<1x1x8x128xf32>
    %173 = vector.shape_cast %172 : vector<1x1x8x128xf32> to vector<8x128xf32>
    %174 = vector.shape_cast %171 : vector<8x128xf32> to vector<1x1x8x128xf32>
    tpu.vector_store %arg4[%c0_130, %c15_131, %c0_132, %c0_133], %174 {strides = array<i32>} : memref<1x16x8x128xf32, #tpu.memory_space<vmem>>, vector<1x1x8x128xf32>,
    return
  }
  func.func @transform_0(%arg0: i32, %arg1: i32) -> (i32, i32, i32, i32) {
    %c0_i32 = arith.constant 0 : i32
    %c0_i32_0 = arith.constant 0 : i32
    %c0_i32_1 = arith.constant 0 : i32
    return %arg0, %c0_i32, %arg1, %c0_i32_0 : i32, i32, i32, i32
  }
  func.func @transform_1(%arg0: i32, %arg1: i32) -> (i32, i32, i32, i32) {
    %c0_i32 = arith.constant 0 : i32
    %c0_i32_0 = arith.constant 0 : i32
    %c0_i32_1 = arith.constant 0 : i32
    return %arg0, %c0_i32, %arg1, %c0_i32_0 : i32, i32, i32, i32
  }
  func.func @transform_2(%arg0: i32, %arg1: i32) -> (i32, i32, i32, i32) {
    %c0_i32 = arith.constant 0 : i32
    %c0_i32_0 = arith.constant 0 : i32
    %c0_i32_1 = arith.constant 0 : i32
    %c0_i32_2 = arith.constant 0 : i32
    return %arg0, %c0_i32, %c0_i32_0, %c0_i32_1 : i32, i32, i32, i32
  }
}

</mosaic_0001>

<llo_original>
// kernel: tpu_custom_call.1
$region0: #{tpu_custom_call.1}
  #allocation0 [shape = 'u32[]', space=smem, size = 0x4, offset = 0x4, fixed_abs, tag = 'smem constant byte address 0x4 - core index']
  #allocation1 [shape = 'u32[144,128]{1,0:T(1,128)}', space=vmem, size = 0x12000, scoped, tag = 'internal scratch']
  %s0 = inlined_call_operand.hbm [shape: f32[2,4,8,128], index: 0, kind: input, shape index: {}]
  %s1 = inlined_call_operand.hbm [shape: s32[2,1,8,128], index: 1, kind: input, shape index: {}]
  %s2 = inlined_call_operand.hbm [shape: f32[2,16,8,128], index: 2, kind: output, shape index: {}]
  %s3 = sld [smem:[#allocation0]]
  $region53: #{tpu_custom_call.1} parent=0
    _
  %s5 = ssub.s32 1, %s3
  %s6 = scalar_select 0, %s5, %s3
  $region1: #{tpu_custom_call.1} parent=0
    #allocation2 [shape = 'u8[32768]{0}', space=vmem, size = 0x8000, scoped, tag = 'input window, operand 0']
    #allocation3 [shape = 's32[2]{0}', space=sflag, size = 0x8, scoped, tag = 'scoped memory for tpu_custom_call.1']
    #allocation4 [shape = 's32[2]{0}', space=sflag, size = 0x8, scoped, tag = 'scoped memory for tpu_custom_call.1']
    #allocation5 [shape = 'u8[8192]{0}', space=vmem, size = 0x2000, scoped, tag = 'input window, operand 1']
    #allocation6 [shape = 's32[2]{0}', space=sflag, size = 0x8, scoped, tag = 'scoped memory for tpu_custom_call.1']
    #allocation7 [shape = 'u8[131072]{0}', space=vmem, size = 0x20000, scoped, tag = 'output window, operand 0']
    %7 = vsyncpa [#allocation3], 0
    %s8 = scalar_lea.sflag [#allocation3], 1
    %9 = vsyncpa %s8, 0
    %10 = vsyncpa [#allocation6], 0
    %s11 = scalar_lea.sflag [#allocation6], 1
    %12 = vsyncpa %s11, 0
    %13 = vsyncpa [#allocation4], 0
    %s14 = scalar_lea.sflag [#allocation4], 1
    %15 = vsyncpa %s14, 0
    loop: start=0, step=1, limit=4
    $region2: #{tpu_custom_call.1} parent=1 // loop_pre_header
      _
    $region3: #{tpu_custom_call.1} parent=1 // loop_header
      %s17 = sphi 0, %s21
      %p18 = scmp.ge.s32.totalorder %s17, 4
      %s24 = sphi 0, %s36
      %s25 = sphi 0, %s32
      %s26 = sphi 0, %s24
      %s27 = sphi 0, %s25
      %s28 = sphi 0, %s26
      %s29 = sphi 0, %s27
      %s41 = sphi 0, %s43
      %s44 = sphi 0, %s41
      %s45 = sphi 0, %s44
      %s61 = sphi 0, %s45
      %s69 = sphi 0, %s71
      %s72 = sphi 0, %s69
      %s73 = sphi 0, %s72
      %s89 = sphi 0, %s73
      %s95 = sphi 0, %s97
      %s98 = sphi 0, %s95
      %s99 = sphi 0, %s98
      %s115 = sphi 0, %s99
    $region4: #{tpu_custom_call.1} parent=1 // loop_header_branch
      %20 = sbr.rel (%p18) target = $region8
    $region5: #{tpu_custom_call.1} parent=1 // loop_body
      %s22 = ssub.s32 %s17, 1
      %s23 = ssub.s32 %s17, 2
      %s30 = sadd.s32 1, %s25
      %p31 = scmp.ge.s32.totalorder %s30, 1
      %s32 = scalar_select %p31, 0, %s30
      %s33 = sadd.s32 1, %s24
      %s34 = scalar_select %p31, %s33, %s24
      %p35 = scmp.ge.s32.totalorder %s34, 2
      %s36 = scalar_select %p35, 0, %s34
      %s37 = ssub.s32 %s24, %s36
      %s38 = ssub.s32 %s25, %s32
      %s39 = sor.u32 %s37, %s38
      %p40 = scmp.eq.s32.totalorder %s39, 0
      %s42 = sadd.s32 %s41, 1
      %s43 = scalar_select %p40, %s41, %s42
      %p46 = pneg %p40
      %p47 = scmp.eq.s32.totalorder %s17, 1
      %p48 = por %p46, %p47
      %p49 = scmp.ne.s32.totalorder %s41, %s44
      %p50 = scmp.eq.s32.totalorder %s17, 0
      %p51 = por %p49, %p50
      %p52 = scmp.ne.s32.totalorder %s41, %s44
      %p53 = scmp.eq.s32.totalorder %s22, 1
      %p54 = por %p52, %p53
      %p55 = scmp.ne.s32.totalorder %s44, %s45
      %p56 = scmp.eq.s32.totalorder %s22, 0
      %p57 = por %p55, %p56
      %p58 = scmp.ne.s32.totalorder %s44, %s45
      %p59 = scmp.eq.s32.totalorder %s23, 1
      %p60 = por %p58, %p59
      %p62 = scmp.ne.s32.totalorder %s45, %s61
      %p63 = scmp.eq.s32.totalorder %s23, 0
      %p64 = por %p62, %p63
      %s65 = ssub.s32 %s24, %s36
      %s66 = ssub.s32 %s25, %s32
      %s67 = sor.u32 %s65, %s66
      %p68 = scmp.eq.s32.totalorder %s67, 0
      %s70 = sadd.s32 %s69, 1
      %s71 = scalar_select %p68, %s69, %s70
      %p74 = pneg %p68
      %p75 = scmp.eq.s32.totalorder %s17, 1
      %p76 = por %p74, %p75
      %p77 = scmp.ne.s32.totalorder %s69, %s72
      %p78 = scmp.eq.s32.totalorder %s17, 0
      %p79 = por %p77, %p78
      %p80 = scmp.ne.s32.totalorder %s69, %s72
      %p81 = scmp.eq.s32.totalorder %s22, 1
      %p82 = por %p80, %p81
      %p83 = scmp.ne.s32.totalorder %s72, %s73
      %p84 = scmp.eq.s32.totalorder %s22, 0
      %p85 = por %p83, %p84
      %p86 = scmp.ne.s32.totalorder %s72, %s73
      %p87 = scmp.eq.s32.totalorder %s23, 1
      %p88 = por %p86, %p87
      %p90 = scmp.ne.s32.totalorder %s73, %s89
      %p91 = scmp.eq.s32.totalorder %s23, 0
      %p92 = por %p90, %p91
      %s93 = ssub.s32 %s24, %s36
      %p94 = scmp.eq.s32.totalorder %s93, 0
      %s96 = sadd.s32 %s95, 1
      %s97 = scalar_select %p94, %s95, %s96
      %p100 = pneg %p94
      %p101 = scmp.eq.s32.totalorder %s17, 1
      %p102 = por %p100, %p101
      %p103 = scmp.ne.s32.totalorder %s95, %s98
      %p104 = scmp.eq.s32.totalorder %s17, 0
      %p105 = por %p103, %p104
      %p106 = scmp.ne.s32.totalorder %s95, %s98
      %p107 = scmp.eq.s32.totalorder %s22, 1
      %p108 = por %p106, %p107
      %p109 = scmp.ne.s32.totalorder %s98, %s99
      %p110 = scmp.eq.s32.totalorder %s22, 0
      %p111 = por %p109, %p110
      %p112 = scmp.ne.s32.totalorder %s98, %s99
      %p113 = scmp.eq.s32.totalorder %s23, 1
      %p114 = por %p112, %p113
      %p116 = scmp.ne.s32.totalorder %s99, %s115
      %p117 = scmp.eq.s32.totalorder %s23, 0
      %p118 = por %p116, %p117
      %p119 = scmp.le.s32.totalorder 1, %s17
      %p120 = scmp.lt.s32.totalorder %s17, 3
      %p121 = pnand %p119, %p120
      %p122 = pneg %p121
      // Predicated region
      $region9: #{tpu_custom_call.1} parent=5 // pred_check
        _
      $region10: #{tpu_custom_call.1} parent=5 // pred_check_branch
        %124 = sbr.rel (%p121) target = $region12
      $region11: #{tpu_custom_call.1} parent=5 // pred_region
        %s125 = ssub.s32 %s17, 1
      $region12: #{tpu_custom_call.1} parent=5 // pred_fallthru
        _
      %p126 = scmp.lt.s32.totalorder %s17, 2
      // Predicated region
      $region13: #{tpu_custom_call.1} parent=5 // pred_check
        %p127 = pneg %p126
      $region14: #{tpu_custom_call.1} parent=5 // pred_check_branch
        %129 = sbr.rel (%p127) target = $region16
      $region15: #{tpu_custom_call.1} parent=5 // pred_region
        // Predicated region
        $region17: #{tpu_custom_call.1} parent=15 // pred_check
          %p130 = pneg %p51
        $region18: #{tpu_custom_call.1} parent=15 // pred_check_branch
          %132 = sbr.rel (%p130) target = $region20
        $region19: #{tpu_custom_call.1} parent=15 // pred_region
          %s133 = sand.u32 %s41, 1
          %s134 = scalar_lea.sflag [#allocation3], %s133
          %s135 = sand.u32 %s41, 1
          %s136 = smul.addr %s135, 32
          %s137 = scalar_lea.vmem [#allocation2], %s136
          %s139 = ssub.s32 512, 512
          %140 = vsyncadd %s134, %s139
          %s141 = smul.addr %s24, 4
          %s142 = sadd.s32 %s25, %s141
          %s143 = smul.addr %s142, 128
          %s144 = scalar_lea.hbm %s0, %s143
          %s145 = sshll.u32 %s137, 4
          %s146 = int_to_ptr.vmem [resolvable:$true] %s145
          %151 = dma.hbm_to_vmem [thread:$0]  %s144, 512, %s146, %s134, 128, 128, 8
        $region20: #{tpu_custom_call.1} parent=15 // pred_fallthru
          _
        // Predicated region
        $region21: #{tpu_custom_call.1} parent=15 // pred_check
          %p152 = pneg %p79
        $region22: #{tpu_custom_call.1} parent=15 // pred_check_branch
          %154 = sbr.rel (%p152) target = $region24
        $region23: #{tpu_custom_call.1} parent=15 // pred_region
          %s155 = sand.u32 %s69, 1
          %s156 = scalar_lea.sflag [#allocation6], %s155
          %s157 = sand.u32 %s69, 1
          %s158 = smul.addr %s157, 8
          %s159 = scalar_lea.vmem [#allocation5], %s158
          %s161 = ssub.s32 128, 128
          %162 = vsyncadd %s156, %s161
          %s163 = sadd.s32 %s25, %s24
          %s164 = smul.addr %s163, 128
          %s165 = scalar_lea.hbm %s1, %s164
          %s167 = sshll.u32 %s159, 4
          %s168 = int_to_ptr.vmem [resolvable:$true] %s167
          %170 = dma.hbm_to_vmem [thread:$0]  %s165, 128, %s168, %s156
        $region24: #{tpu_custom_call.1} parent=15 // pred_fallthru
          _
      $region16: #{tpu_custom_call.1} parent=5 // pred_fallthru
        _
      %p171 = scmp.le.s32.totalorder 1, %s17
      %p172 = scmp.lt.s32.totalorder %s17, 3
      %p173 = pnand %p171, %p172
      %p174 = pneg %p173
      // Predicated region
      $region25: #{tpu_custom_call.1} parent=5 // pred_check
        _
      $region26: #{tpu_custom_call.1} parent=5 // pred_check_branch
        %176 = sbr.rel (%p173) target = $region28
      $region27: #{tpu_custom_call.1} parent=5 // pred_region
        %s177 = ssub.s32 %s17, 1
        %s178 = sand.u32 %s44, 1
        %s179 = scalar_lea.sflag [#allocation3], %s178
        %s180 = sand.u32 %s44, 1
        %s181 = smul.addr %s180, 32
        %s182 = scalar_lea.vmem [#allocation2], %s181
        // Predicated region
        $region29: #{tpu_custom_call.1} parent=27 // pred_check
          %p183 = pneg %p57
        $region30: #{tpu_custom_call.1} parent=27 // pred_check_branch
          %185 = sbr.rel (%p183) target = $region32
        $region31: #{tpu_custom_call.1} parent=27 // pred_region
          %186 = dma.done %s179, 512
        $region32: #{tpu_custom_call.1} parent=27 // pred_fallthru
          _
        %s187 = sand.u32 %s72, 1
        %s188 = scalar_lea.sflag [#allocation6], %s187
        %s189 = sand.u32 %s72, 1
        %s190 = smul.addr %s189, 8
        %s191 = scalar_lea.vmem [#allocation5], %s190
        // Predicated region
        $region33: #{tpu_custom_call.1} parent=27 // pred_check
          %p192 = pneg %p85
        $region34: #{tpu_custom_call.1} parent=27 // pred_check_branch
          %194 = sbr.rel (%p192) target = $region36
        $region35: #{tpu_custom_call.1} parent=27 // pred_region
          %195 = dma.done %s188, 128
        $region36: #{tpu_custom_call.1} parent=27 // pred_fallthru
          _
        %s196 = sand.u32 %s44, 1
        %s197 = scalar_lea.sflag [#allocation3], %s196
        %s198 = sand.u32 %s44, 1
        %s199 = smul.addr %s198, 32
        %s200 = scalar_lea.vmem [#allocation2], %s199
        %p201 = pneg %p57
        %p202 = pneg %p54
        %s203 = sand.u32 %s72, 1
        %s204 = scalar_lea.sflag [#allocation6], %s203
        %s205 = sand.u32 %s72, 1
        %s206 = smul.addr %s205, 8
        %s207 = scalar_lea.vmem [#allocation5], %s206
        %p208 = pneg %p85
        %p209 = pneg %p82
        %p210 = pneg %p111
        %p211 = pneg %p108
        %s212 = sand.u32 %s98, 1
        %s213 = scalar_lea.sflag [#allocation4], %s212
        %s214 = sand.u32 %s98, 1
        %s215 = smul.addr %s214, 128
        %s216 = scalar_lea.vmem [#allocation7], %s215
        %p217 = scmp.eq.s32.totalorder %s27, 0
        // Predicated region
        $region37: #{tpu_custom_call.1} parent=27 // pred_check
          %p218 = pneg %p217
        $region38: #{tpu_custom_call.1} parent=27 // pred_check_branch
          %220 = sbr.rel (%p218) target = $region40
        $region39: #{tpu_custom_call.1} parent=27 // pred_region
          %221 = vst [vmem:[%s216] sm:$0xff] 0.0
          %222 = vst [vmem:[%s216 + $0x8] sm:$0xff] 0.0
          %223 = vst [vmem:[%s216 + $0x10] sm:$0xff] 0.0
          %224 = vst [vmem:[%s216 + $0x18] sm:$0xff] 0.0
          %225 = vst [vmem:[%s216 + $0x20] sm:$0xff] 0.0
          %226 = vst [vmem:[%s216 + $0x28] sm:$0xff] 0.0
          %227 = vst [vmem:[%s216 + $0x30] sm:$0xff] 0.0
          %228 = vst [vmem:[%s216 + $0x38] sm:$0xff] 0.0
          %229 = vst [vmem:[%s216 + $0x40] sm:$0xff] 0.0
          %230 = vst [vmem:[%s216 + $0x48] sm:$0xff] 0.0
          %231 = vst [vmem:[%s216 + $0x50] sm:$0xff] 0.0
          %232 = vst [vmem:[%s216 + $0x58] sm:$0xff] 0.0
          %233 = vst [vmem:[%s216 + $0x60] sm:$0xff] 0.0
          %234 = vst [vmem:[%s216 + $0x68] sm:$0xff] 0.0
          %235 = vst [vmem:[%s216 + $0x70] sm:$0xff] 0.0
          %236 = vst [vmem:[%s216 + $0x78] sm:$0xff] 0.0
        $region40: #{tpu_custom_call.1} parent=27 // pred_fallthru
          _
        %v237 = vld [vmem:[%s191] sm:$0xff]
        %v238 = vld [vmem:[%s182] sm:$0xff]
        %s239 = scalar_lea.vmem %s182, 8 [#allocation2]
        %v240 = vld [vmem:[%s239] sm:$0xff]
        %s241 = scalar_lea.vmem %s182, 16 [#allocation2]
        %v242 = vld [vmem:[%s241] sm:$0xff]
        %s243 = scalar_lea.vmem %s182, 24 [#allocation2]
        %v244 = vld [vmem:[%s243] sm:$0xff]
        %v245 = vmax.f32 %v238, %v240
        %v246 = vmax.f32 %v245, %v242
        %v247 = vmax.f32 %v246, %v244
        %v248 = vsub.f32 %v238, %v247
        %v249 = vmul.f32 %v248, 1.442695
        %v250 = vpow.pop %v249
        %v251 = vsub.f32 %v240, %v247
        %v252 = vmul.f32 %v251, 1.442695
        %v253 = vpow.pop %v252
        %v254 = vsub.f32 %v242, %v247
        %v255 = vmul.f32 %v254, 1.442695
        %v256 = vpow.pop %v255
        %v257 = vsub.f32 %v244, %v247
        %v258 = vmul.f32 %v257, 1.442695
        %v259 = vpow.pop %v258
        %v260 = vadd.f32 %v250, %v253
        %v261 = vadd.f32 %v260, %v256
        %v262 = vadd.f32 %v261, %v259
        %v263 = vrcp.pop %v262
        %v264 = vlog2.pop %v262
        %v265 = vmul.f32 %v264, 0.6931472
        %v266 = vadd.f32 %v265, %v247
        %v267 = vmul.f32 %v250, %v263
        %vm268 = vcmp.eq.s32.totalorder %v237, 0
        %v269 = vsel %vm268, 1, 0
        %v270 = vcvt.s32.f32 %v269
        %v271 = vsub.f32 %v266, %v238
        %v272 = vmul.f32 %v270, %v271
        %v273 = vadd.f32 %v272, 0.0
        %v274 = vmul.f32 %v270, %v267
        %v275 = vadd.f32 %v274, 0.0
        %v276 = vadd.f32 %v267, 0.0
        %v277 = vadd.f32 %v270, 0.0
        %v278 = vmul.f32 %v253, %v263
        %vm279 = vcmp.eq.s32.totalorder %v237, 1
        %v280 = vsel %vm279, 1, 0
        %v281 = vcvt.s32.f32 %v280
        %v282 = vsub.f32 %v266, %v240
        %v283 = vmul.f32 %v281, %v282
        %v284 = vadd.f32 %v283, 0.0
        %v285 = vmul.f32 %v281, %v278
        %v286 = vadd.f32 %v285, 0.0
        %v287 = vadd.f32 %v278, 0.0
        %v288 = vadd.f32 %v281, 0.0
        %v289 = vmul.f32 %v256, %v263
        %vm290 = vcmp.eq.s32.totalorder %v237, 2
        %v291 = vsel %vm290, 1, 0
        %v292 = vcvt.s32.f32 %v291
        %v293 = vsub.f32 %v266, %v242
        %v294 = vmul.f32 %v292, %v293
        %v295 = vadd.f32 %v294, 0.0
        %v296 = vmul.f32 %v292, %v289
        %v297 = vadd.f32 %v296, 0.0
        %v298 = vadd.f32 %v289, 0.0
        %v299 = vadd.f32 %v292, 0.0
        %v300 = vmul.f32 %v259, %v263
        %vm301 = vcmp.eq.s32.totalorder %v237, 3
        %v302 = vsel %vm301, 1, 0
        %v303 = vcvt.s32.f32 %v302
        %v304 = vsub.f32 %v266, %v244
        %v305 = vmul.f32 %v303, %v304
        %v306 = vadd.f32 %v305, 0.0
        %v307 = vmul.f32 %v303, %v300
        %v308 = vadd.f32 %v307, 0.0
        %v309 = vadd.f32 %v300, 0.0
        %v310 = vadd.f32 %v303, 0.0
        %v311 = vld [vmem:[%s216] sm:$0xff]
        %v312 = vadd.f32 %v311, %v273
        %313 = vst [vmem:[%s216] sm:$0xff] %v312
        %s314 = scalar_lea.vmem %s216, 32 [#allocation7]
        %v315 = vld [vmem:[%s314] sm:$0xff]
        %v316 = vadd.f32 %v315, %v275
        %317 = vst [vmem:[%s314] sm:$0xff] %v316
        %s318 = scalar_lea.vmem %s216, 64 [#allocation7]
        %v319 = vld [vmem:[%s318] sm:$0xff]
        %v320 = vadd.f32 %v319, %v276
        %321 = vst [vmem:[%s318] sm:$0xff] %v320
        %s322 = scalar_lea.vmem %s216, 96 [#allocation7]
        %v323 = vld [vmem:[%s322] sm:$0xff]
        %v324 = vadd.f32 %v323, %v277
        %325 = vst [vmem:[%s322] sm:$0xff] %v324
        %s326 = scalar_lea.vmem %s216, 8 [#allocation7]
        %v327 = vld [vmem:[%s326] sm:$0xff]
        %v328 = vadd.f32 %v327, %v284
        %329 = vst [vmem:[%s326] sm:$0xff] %v328
        %s330 = scalar_lea.vmem %s216, 40 [#allocation7]
        %v331 = vld [vmem:[%s330] sm:$0xff]
        %v332 = vadd.f32 %v331, %v286
        %333 = vst [vmem:[%s330] sm:$0xff] %v332
        %s334 = scalar_lea.vmem %s216, 72 [#allocation7]
        %v335 = vld [vmem:[%s334] sm:$0xff]
        %v336 = vadd.f32 %v335, %v287
        %337 = vst [vmem:[%s334] sm:$0xff] %v336
        %s338 = scalar_lea.vmem %s216, 104 [#allocation7]
        %v339 = vld [vmem:[%s338] sm:$0xff]
        %v340 = vadd.f32 %v339, %v288
        %341 = vst [vmem:[%s338] sm:$0xff] %v340
        %s342 = scalar_lea.vmem %s216, 16 [#allocation7]
        %v343 = vld [vmem:[%s342] sm:$0xff]
        %v344 = vadd.f32 %v343, %v295
        %345 = vst [vmem:[%s342] sm:$0xff] %v344
        %s346 = scalar_lea.vmem %s216, 48 [#allocation7]
        %v347 = vld [vmem:[%s346] sm:$0xff]
        %v348 = vadd.f32 %v347, %v297
        %349 = vst [vmem:[%s346] sm:$0xff] %v348
        %s350 = scalar_lea.vmem %s216, 80 [#allocation7]
        %v351 = vld [vmem:[%s350] sm:$0xff]
        %v352 = vadd.f32 %v351, %v298
        %353 = vst [vmem:[%s350] sm:$0xff] %v352
        %s354 = scalar_lea.vmem %s216, 112 [#allocation7]
        %v355 = vld [vmem:[%s354] sm:$0xff]
        %v356 = vadd.f32 %v355, %v299
        %357 = vst [vmem:[%s354] sm:$0xff] %v356
        %s358 = scalar_lea.vmem %s216, 24 [#allocation7]
        %v359 = vld [vmem:[%s358] sm:$0xff]
        %v360 = vadd.f32 %v359, %v306
        %361 = vst [vmem:[%s358] sm:$0xff] %v360
        %s362 = scalar_lea.vmem %s216, 56 [#allocation7]
        %v363 = vld [vmem:[%s362] sm:$0xff]
        %v364 = vadd.f32 %v363, %v308
        %365 = vst [vmem:[%s362] sm:$0xff] %v364
        %s366 = scalar_lea.vmem %s216, 88 [#allocation7]
        %v367 = vld [vmem:[%s366] sm:$0xff]
        %v368 = vadd.f32 %v367, %v309
        %369 = vst [vmem:[%s366] sm:$0xff] %v368
        %s370 = scalar_lea.vmem %s216, 120 [#allocation7]
        %v371 = vld [vmem:[%s370] sm:$0xff]
        %v372 = vadd.f32 %v371, %v310
        %373 = vst [vmem:[%s370] sm:$0xff] %v372
        %s374 = sand.u32 %s98, 1
        %s375 = scalar_lea.sflag [#allocation4], %s374
        %s376 = sand.u32 %s98, 1
        %s377 = smul.addr %s376, 128
        %s378 = scalar_lea.vmem [#allocation7], %s377
        // Predicated region
        $region41: #{tpu_custom_call.1} parent=27 // pred_check
          %p379 = pneg %p108
        $region42: #{tpu_custom_call.1} parent=27 // pred_check_branch
          %381 = sbr.rel (%p379) target = $region44
        $region43: #{tpu_custom_call.1} parent=27 // pred_region
          %s383 = ssub.s32 2048, 2048
          %384 = vsyncadd %s375, %s383
          %s385 = smul.addr %s26, 16
          %s386 = smul.addr %s385, 128
          %s387 = scalar_lea.hbm %s2, %s386
          %s388 = sshll.u32 %s378, 4
          %s389 = int_to_ptr.vmem [resolvable:$true] %s388
          %394 = dma.vmem_to_hbm [thread:$0]  %s389, 2048, %s387, %s375, 128, 128, 8
        $region44: #{tpu_custom_call.1} parent=27 // pred_fallthru
          _
      $region28: #{tpu_custom_call.1} parent=5 // pred_fallthru
        _
      %p395 = scmp.le.s32.totalorder 2, %s17
      // Predicated region
      $region45: #{tpu_custom_call.1} parent=5 // pred_check
        %p396 = pneg %p395
      $region46: #{tpu_custom_call.1} parent=5 // pred_check_branch
        %398 = sbr.rel (%p396) target = $region48
      $region47: #{tpu_custom_call.1} parent=5 // pred_region
        %s399 = ssub.s32 %s17, 2
        // Predicated region
        $region49: #{tpu_custom_call.1} parent=47 // pred_check
          %p400 = pneg %p114
        $region50: #{tpu_custom_call.1} parent=47 // pred_check_branch
          %402 = sbr.rel (%p400) target = $region52
        $region51: #{tpu_custom_call.1} parent=47 // pred_region
          %s403 = sand.u32 %s99, 1
          %s404 = scalar_lea.sflag [#allocation4], %s403
          %s405 = sand.u32 %s99, 1
          %s406 = smul.addr %s405, 128
          %s407 = scalar_lea.vmem [#allocation7], %s406
          %408 = dma.done %s404, 2048
        $region52: #{tpu_custom_call.1} parent=47 // pred_fallthru
          _
      $region48: #{tpu_custom_call.1} parent=5 // pred_fallthru
        _
    $region6: #{tpu_custom_call.1} parent=1 // loop_footer
      %s21 = sadd.s32 1, %s17
    $region7: #{tpu_custom_call.1} parent=1 // loop_footer_branch
      %16 = sbr.rel target = $region3
    $region8: #{tpu_custom_call.1} parent=1 // loop_exit
      _
    %409 = vsyncpa [#allocation3], 1
    %s410 = scalar_lea.sflag [#allocation3], 1
    %411 = vsyncpa %s410, 1
    %412 = vsyncpa [#allocation6], 1
    %s413 = scalar_lea.sflag [#allocation6], 1
    %414 = vsyncpa %s413, 1
    %415 = vsyncpa [#allocation4], 1
    %s416 = scalar_lea.sflag [#allocation4], 1
    %417 = vsyncpa %s416, 1

</llo_original>
